<compile_context>
chip_gen: v5e
topology: v5e:2x2
jax: 0.10.0
libtpu: 0.0.40
codegen_flags: <defaults>
</compile_context>

<pallas_src>
import math
import numpy as np
import jax
import jax.numpy as jnp
from jax import lax
from jax.experimental import pallas as pl
from jax.experimental.pallas import tpu as pltpu


_LANE = 128
_LOG_CLAMP = 1e-30            # guards log(0) for padded lanes / p == 0
_CE_MAX = 70.0                # -log(1e-30) ~= 69.08 < 70
_BISECT_ITERS = 40            # threshold bisection steps (interval -> ~6e-11)
_SEL_ROWS = 8                 # rows per selection block (one sublane group)
_MAX_TILE_LANES = 64 * 1024   # diminishing returns beyond this


def _cdiv(a, b):
    return -(-a // b)


def _round_up(x, m):
    return ((x + m - 1) // m) * m


def _vmem_capacity_bytes():
    try:
        return int(pltpu.get_tpu_info().vmem_capacity_bytes)
    except Exception:
        return 64 << 20       # v7x per-TC VMEM; safe lower bound for v5e/v6e too


def seg_loss(preds, masks, n_objs, alpha=1.0, bootstrap=0.4, eps=1e-7):
    """preds, masks: [N, T, C, H, W]; n_objs: [N] int (contract: n_objs >= 2)."""
    N, T, C, H, W = preds.shape
    HW = H * W
    NT = N * T

    in_dtype = preds.dtype
    isz = jnp.dtype(in_dtype).itemsize
    ce_dtype = jnp.bfloat16 if in_dtype == jnp.bfloat16 else jnp.float32
    ce_isz = jnp.dtype(ce_dtype).itemsize

    # ---------------- tiling parameters ----------------
    TB = 1 if C >= 8 else _cdiv(8, C)          # slabs per block: fill 8 sublanes
    TBC = TB * C
    row_mult = TB * _SEL_ROWS // math.gcd(TB, _SEL_ROWS)   # lcm(TB, 8)
    NT_pad = _round_up(NT, row_mult)           # multiple of 8 -> selection blocks
    G = NT_pad // TB                           # >= 2 in practice -> both v7x TCs

    # Generation-aware VMEM budget (v7x has only 64 MiB per TensorCore).
    vmem_budget = int(0.70 * _vmem_capacity_bytes())
    # Conservative bytes per HW lane: double-buffered in/out blocks + in-kernel
    # f32 temporaries (per-slab live set ~ (C, HW_T) x a few) + small extras.
    per_lane = 2 * (TBC * isz + TB * 4 + TB * ce_isz) + (6 * C + 8) * 4
    avail_lanes = max(_LANE, (vmem_budget - (4 << 20)) // per_lane)
    cap_lanes = max(_LANE, min(_MAX_TILE_LANES, (avail_lanes // _LANE) * _LANE))
    KT = _cdiv(HW, cap_lanes)
    HW_T = _round_up(_cdiv(HW, KT), _LANE)     # balanced tiles -> minimal padding
    HW_pad = KT * HW_T

    # ---------------- wrapper-side layout ----------------
    # Zero padding of preds is benign: padded p == 0 and padded idx == -1 give
    # zero CE weight and zero inter/union contributions.
    p = preds.reshape(NT, C, HW)
    p = jnp.pad(p, ((0, NT_pad - NT), (0, 0), (0, HW_pad - HW)))
    preds_r = p.reshape(G, TBC, HW_pad)                      # native dtype on the wire

    # Masks -> per-pixel class index (one-hot contract); pad with -1 sentinel.
    idx = jnp.argmax(masks, axis=2).astype(jnp.int32).reshape(NT, HW)
    idx = jnp.pad(idx, ((0, NT_pad - NT), (0, HW_pad - HW)), constant_values=-1)
    idx_r = idx.reshape(G, TB, HW_pad)

    n_objs = jnp.asarray(n_objs, jnp.int32)
    nobj_slab = jnp.pad(jnp.repeat(n_objs, T), (0, NT_pad - NT))   # [NT_pad] int32

    # ---------------- main streaming kernel ----------------
    def kernel(nobj_ref, pred_ref, idx_ref, ce_ref, iu_ref):
        g = pl.program_id(0)
        k = pl.program_id(1)

        @pl.when(k == 0)
        def _():
            iu_ref[...] = jnp.zeros_like(iu_ref)

        ch = lax.broadcasted_iota(jnp.int32, (C, 1), 0)             # (C, 1)

        for t in range(TB):                                         # static, unrolled
            lo = t * C
            # Per-slab ref slices bound f32 temporaries to (C, HW_T) (review #6).
            p_t = pred_ref[0, pl.ds(lo, C), :].astype(jnp.float32)  # (C, HW_T)
            idx_t = idx_ref[0, pl.ds(t, 1), :]                      # (1, HW_T) i32
            m_t = (idx_t == ch).astype(jnp.float32)                 # (C, HW_T)
            pm_t = p_t * m_t

            # -------- cross-entropy (one-hot identity -> one log per pixel)
            s_t = jnp.sum(pm_t, axis=0, keepdims=True)              # (1, HW_T)
            nob = nobj_ref[g * TB + t]                               # SMEM scalar
            w_t = jnp.logical_and(idx_t >= 0, idx_t < nob).astype(jnp.float32)
            ce_t = w_t * (-jnp.log(jnp.maximum(s_t, _LOG_CLAMP)))
            ce_ref[0, pl.ds(t, 1), :] = ce_t.astype(ce_dtype)

            # -------- mask IoU partial sums (one-hot: min=p*m, max=p+m-p*m)
            inter_t = jnp.sum(pm_t, axis=1, keepdims=True)          # (C, 1)
            union_t = jnp.sum(p_t + m_t - pm_t, axis=1, keepdims=True)
            iu_ref[0, pl.ds(lo, C), :] += inter_t
            iu_ref[0, pl.ds(TBC + lo, C), :] += union_t

    main_need = per_lane * HW_T + 8 * TBC * 4 + (4 << 20)
    main_vmem = int(min(vmem_budget, max(main_need, 32 << 20)))

    ce_map, iu = pl.pallas_call(
        kernel,
        out_shape=(
            jax.ShapeDtypeStruct((G, TB, HW_pad), ce_dtype),        # per-pixel CE
            jax.ShapeDtypeStruct((G, 2 * TBC, 1), jnp.float32),     # [inter|union]
        ),
        grid_spec=pltpu.PrefetchScalarGridSpec(
            num_scalar_prefetch=1,
            grid=(G, KT),
            in_specs=[
                pl.BlockSpec((1, TBC, HW_T), lambda g, k, nob: (g, 0, k)),
                pl.BlockSpec((1, TB, HW_T), lambda g, k, nob: (g, 0, k)),
            ],
            out_specs=[
                pl.BlockSpec((1, TB, HW_T), lambda g, k, nob: (g, 0, k)),
                pl.BlockSpec((1, 2 * TBC, 1), lambda g, k, nob: (g, 0, 0)),
            ],
        ),
        compiler_params=pltpu.CompilerParams(
            dimension_semantics=("parallel", "arbitrary"),
            vmem_limit_bytes=main_vmem,
        ),
    )(nobj_slab, preds_r, idx_r)

    # ---------------- bootstrapped CE selection ----------------
    ce_rows = ce_map.reshape(NT_pad, HW_pad)          # free contiguous reshape

    if bootstrap > 0:
        num = max(1, int(HW * bootstrap))
        num_f = float(num)
        sel_need = _SEL_ROWS * HW_pad * (2 * ce_isz + 4) + (2 << 20)

        if sel_need <= vmem_budget:
            # Exact mean of the top-`num` CE values per (n,t) row without a sort:
            # the row stays in VMEM; bisect on the threshold using counts, then
            # S = sum(ce > thr) + (num - count) * thr  (ties handled exactly).
            def sel_kernel(ce_ref, out_ref):
                ce = ce_ref[...].astype(jnp.float32)                # (8, HW_pad)
                lo0 = jnp.zeros((_SEL_ROWS, 1), jnp.float32)
                hi0 = jnp.full((_SEL_ROWS, 1), _CE_MAX, jnp.float32)

                def body(_, carry):
                    lo, hi = carry
                    mid = 0.5 * (lo + hi)
                    cnt = jnp.sum((ce > mid).astype(jnp.float32), axis=1,
                                  keepdims=True)
                    take = cnt >= num_f
                    return jnp.where(take, mid, lo), jnp.where(take, hi, mid)

                _, hi = lax.fori_loop(0, _BISECT_ITERS, body, (lo0, hi0))
                above = (ce > hi).astype(jnp.float32)
                cnt = jnp.sum(above, axis=1, keepdims=True)
                ssum = jnp.sum(ce * above, axis=1, keepdims=True)
                out_ref[...] = (ssum + (num_f - cnt) * hi) * (1.0 / num_f)

            sel = pl.pallas_call(
                sel_kernel,
                out_shape=jax.ShapeDtypeStruct((NT_pad, 1), jnp.float32),
                grid=(NT_pad // _SEL_ROWS,),
                in_specs=[pl.BlockSpec((_SEL_ROWS, HW_pad), lambda r: (r, 0))],
                out_specs=pl.BlockSpec((_SEL_ROWS, 1), lambda r: (r, 0)),
                compiler_params=pltpu.CompilerParams(
                    dimension_semantics=("parallel",),
                    vmem_limit_bytes=int(min(vmem_budget,
                                             max(sel_need, 32 << 20))),
                ),
            )(ce_rows)
            cls_rows = sel[:NT, 0].reshape(N, T)                    # per-(n,t) mean
        else:
            # TODO(synk): row larger than the VMEM budget -> fall back to XLA
            # top_k (slow for huge HW); a multi-pass histogram kernel would be
            # the next step here.
            top_vals, _ = lax.top_k(
                ce_rows[:NT, :HW].astype(jnp.float32).reshape(N, T, HW), num)
            cls_rows = jnp.mean(top_vals, axis=2)
        cls_per_n = jnp.mean(cls_rows, axis=1)                      # [N]
    else:
        ce_sum = jnp.sum(ce_rows[:NT].astype(jnp.float32).reshape(N, -1), axis=1)
        cls_per_n = ce_sum / float(HW * T)

    # ---------------- IoU glue (tiny, plain JAX) ----------------
    iu = iu.reshape(G, 2, TB, C)
    iu = jnp.transpose(iu, (0, 2, 1, 3)).reshape(NT_pad, 2, C)[:NT]
    inter = iu[:, 0, :].reshape(N, T, C)
    union = iu[:, 1, :].reshape(N, T, C)

    ch = jnp.arange(C, dtype=jnp.int32)
    iou_mask = ((ch[None, :] >= 1) & (ch[None, :] < n_objs[:, None])).astype(jnp.float32)
    k_div = (n_objs - 1).astype(jnp.float32)          # contract: n_objs >= 2
    ratio = (inter + eps) / (union + eps)                            # [N, T, C]
    mean_iou = jnp.sum(ratio * iou_mask[:, None, :], axis=2) / k_div[:, None]
    iou_per_n = jnp.mean(1.0 - mean_iou, axis=1)                     # [N]

    cls_loss = jnp.sum(cls_per_n)
    iou_loss = jnp.sum(iou_per_n)
    loss = (cls_loss + alpha * iou_loss) / N
    return loss, {"loss_mask_cls": cls_loss / N, "loss_mask_iou": iou_loss / N}


def _ref_segloss(preds, masks, n_objs, alpha=1.0, bootstrap=0.4, eps=1e-7):
    """Pure-numpy mirror of the PyTorch SegLoss forward."""
    N, T, C, H, W = preds.shape
    cls_loss = 0.0
    iou_loss = 0.0
    for i in range(N):
        n_obj = int(n_objs[i])
        p = preds[i, :, :n_obj]
        m = masks[i, :, :n_obj]
        num = int(H * W * bootstrap)
        l = np.sum(-np.log(p) * m, axis=1).reshape(T, -1)
        ml = -np.sort(-l, axis=-1)
        cls_loss += np.mean(ml[:, :num])
        pk = preds[i, :, 1:n_obj]
        mk = masks[i, :, 1:n_obj]
        acc = 0.0
        for t in range(T):
            inter = np.minimum(pk[t], mk[t]).sum(axis=(1, 2))
            union = np.maximum(pk[t], mk[t]).sum(axis=(1, 2))
            iou = np.sum((inter + eps) / (union + eps)) / pk.shape[1]
            acc += 1.0 - iou
        iou_loss += acc / T
    loss = (cls_loss + alpha * iou_loss) / N
    return loss, cls_loss / N, iou_loss / N


if __name__ == "__main__":
    N, T, C, H, W = 2, 3, 4, 16, 16   # [N, T, no, H, W], "no" includes bg

    key = jax.random.PRNGKey(0)
    k1, k2 = jax.random.split(key)
    pred_logits = jax.random.normal(k1, (N, T, C, H, W), jnp.float32)
    preds = jax.nn.softmax(pred_logits, axis=2)                     # probs over objects
    mask_idx = jnp.argmax(jax.random.normal(k2, (N, T, C, H, W), jnp.float32), axis=2)
    masks = jax.nn.one_hot(mask_idx, C, axis=2, dtype=jnp.float32)  # one-hot over object dim
    n_objs = np.array([3, 4], dtype=np.int32)                       # per-sample #objects (>=2)

    loss, stats = seg_loss(preds, masks, n_objs)
    loss = jax.block_until_ready(loss)

    ref_loss, ref_cls, ref_iou = _ref_segloss(
        np.asarray(preds, np.float32), np.asarray(masks, np.float32), n_objs
    )
    assert np.allclose(float(loss), ref_loss, rtol=1e-5, atol=1e-6), (float(loss), ref_loss)
    assert np.allclose(float(stats["loss_mask_cls"]), ref_cls, rtol=1e-5, atol=1e-6)
    assert np.allclose(float(stats["loss_mask_iou"]), ref_iou, rtol=1e-5, atol=1e-6)
    print("KERNEL_OK")
</pallas_src>

<mosaic_0001>
module attributes {stable_mosaic.version = 11 : i64} {
  func.func @kernel(%arg0: i32, %arg1: i32, %arg2: memref<8xi32, #tpu.memory_space<smem>>, %arg3: memref<1x8x256xf32, #tpu.memory_space<vmem>>, %arg4: memref<1x2x256xi32, #tpu.memory_space<vmem>>, %arg5: memref<1x2x256xf32, #tpu.memory_space<vmem>>, %arg6: memref<1x16x1xf32, #tpu.memory_space<vmem>>) attributes {dimension_semantics = [#tpu.dimension_semantics<parallel>, #tpu.dimension_semantics<arbitrary>], iteration_bounds = array<i64: 4, 1>, scalar_prefetch = 1 : i64, scratch_operands = 0 : i64, tpu.core_type = #tpu.core_type<tc>, window_params = [{transform_indices = @transform_0, window_bounds = array<i64: 1, 8, 256>}, {transform_indices = @transform_1, window_bounds = array<i64: 1, 2, 256>}, {transform_indices = @transform_2, window_bounds = array<i64: 1, 2, 256>}, {transform_indices = @transform_3, window_bounds = array<i64: 1, 16, 1>}]} {
    %c0_i32 = arith.constant 0 : i32
    %0 = arith.cmpi eq, %arg1, %c0_i32 : i32
    %1 = arith.extui %0 : i1 to i32
    %c0_i32_0 = arith.constant 0 : i32
    %2 = arith.cmpi ne, %1, %c0_i32_0 : i32
    scf.if %2 {
      %cst_51 = arith.constant 0.000000e+00 : f32
      %104 = vector.broadcast %cst_51 : f32 to vector<1x16x1xf32>
      %c0_52 = arith.constant 0 : index
      %c0_53 = arith.constant 0 : index
      %c0_54 = arith.constant 0 : index
      %105 = vector.load %arg6[%c0_52, %c0_53, %c0_54] : memref<1x16x1xf32, #tpu.memory_space<vmem>>, vector<1x16x1xf32>
      tpu.vector_store %arg6[%c0_52, %c0_53, %c0_54], %104 {strides = array<i32>} : memref<1x16x1xf32, #tpu.memory_space<vmem>>, vector<1x16x1xf32>,
    } else {
    }
    %3 = tpu.iota {dimensions = array<i32: 0>} : vector<4x1xi32>
    %c0 = arith.constant 0 : index
    %c0_1 = arith.constant 0 : index
    %c0_2 = arith.constant 0 : index
    %4 = vector.load %arg3[%c0, %c0_1, %c0_2] : memref<1x8x256xf32, #tpu.memory_space<vmem>>, vector<1x4x256xf32>
    %5 = vector.shape_cast %4 : vector<1x4x256xf32> to vector<4x256xf32>
    %c0_3 = arith.constant 0 : index
    %c0_4 = arith.constant 0 : index
    %c0_5 = arith.constant 0 : index
    %6 = vector.load %arg4[%c0_3, %c0_4, %c0_5] : memref<1x2x256xi32, #tpu.memory_space<vmem>>, vector<1x1x256xi32>
    %7 = vector.shape_cast %6 : vector<1x1x256xi32> to vector<1x256xi32>
    %8 = vector.broadcast %7 : vector<1x256xi32> to vector<4x256xi32>
    %9 = vector.broadcast %3 : vector<4x1xi32> to vector<4x256xi32>
    %10 = arith.cmpi eq, %8, %9 : vector<4x256xi32>
    %11 = arith.extui %10 : vector<4x256xi1> to vector<4x256xi32>
    %12 = arith.sitofp %11 : vector<4x256xi32> to vector<4x256xf32>
    %13 = arith.mulf %5, %12 : vector<4x256xf32>
    %cst = arith.constant dense<0.000000e+00> : vector<256xf32>
    %14 = vector.multi_reduction <add>, %13, %cst [0] : vector<4x256xf32> to vector<256xf32>
    %15 = vector.shape_cast %14 : vector<256xf32> to vector<1x256xf32>
    %c2_i32 = arith.constant 2 : i32
    %16 = arith.muli %arg0, %c2_i32 : i32
    %c0_i32_6 = arith.constant 0 : i32
    %17 = arith.addi %16, %c0_i32_6 : i32
    %18 = arith.index_cast %17 : i32 to index
    %19 = memref.load %arg2[%18] : memref<8xi32, #tpu.memory_space<smem>>
    %c0_i32_7 = arith.constant 0 : i32
    %20 = vector.broadcast %c0_i32_7 : i32 to vector<1x256xi32>
    %21 = arith.cmpi sge, %7, %20 : vector<1x256xi32>
    %22 = vector.broadcast %19 : i32 to vector<1x256xi32>
    %23 = arith.cmpi slt, %7, %22 : vector<1x256xi32>
    %24 = arith.andi %21, %23 : vector<1x256xi1>
    %25 = arith.extui %24 : vector<1x256xi1> to vector<1x256xi32>
    %26 = arith.sitofp %25 : vector<1x256xi32> to vector<1x256xf32>
    %cst_8 = arith.constant 1.000000e-30 : f32
    %27 = vector.broadcast %cst_8 : f32 to vector<1x256xf32>
    %28 = arith.maximumf %15, %27 : vector<1x256xf32>
    %29 = math.log %28 : vector<1x256xf32>
    %cst_9 = arith.constant 0.000000e+00 : f32
    %30 = vector.broadcast %cst_9 : f32 to vector<1x256xf32>
    %31 = arith.subf %30, %29 : vector<1x256xf32>
    %32 = arith.mulf %26, %31 : vector<1x256xf32>
    %c0_10 = arith.constant 0 : index
    %c0_11 = arith.constant 0 : index
    %c0_12 = arith.constant 0 : index
    %33 = vector.load %arg5[%c0_10, %c0_11, %c0_12] : memref<1x2x256xf32, #tpu.memory_space<vmem>>, vector<1x1x256xf32>
    %34 = vector.shape_cast %33 : vector<1x1x256xf32> to vector<1x256xf32>
    %35 = vector.shape_cast %32 : vector<1x256xf32> to vector<1x1x256xf32>
    tpu.vector_store %arg5[%c0_10, %c0_11, %c0_12], %35 {strides = array<i32>} : memref<1x2x256xf32, #tpu.memory_space<vmem>>, vector<1x1x256xf32>,
    %cst_13 = arith.constant dense<0.000000e+00> : vector<4xf32>
    %36 = vector.multi_reduction <add>, %13, %cst_13 [1] : vector<4x256xf32> to vector<4xf32>
    %37 = vector.shape_cast %36 : vector<4xf32> to vector<4x1xf32>
    %38 = arith.addf %5, %12 : vector<4x256xf32>
    %39 = arith.subf %38, %13 : vector<4x256xf32>
    %cst_14 = arith.constant dense<0.000000e+00> : vector<4xf32>
    %40 = vector.multi_reduction <add>, %39, %cst_14 [1] : vector<4x256xf32> to vector<4xf32>
    %41 = vector.shape_cast %40 : vector<4xf32> to vector<4x1xf32>
    %c0_15 = arith.constant 0 : index
    %c0_16 = arith.constant 0 : index
    %c0_17 = arith.constant 0 : index
    %42 = vector.load %arg6[%c0_15, %c0_16, %c0_17] : memref<1x16x1xf32, #tpu.memory_space<vmem>>, vector<1x4x1xf32>
    %43 = vector.shape_cast %42 : vector<1x4x1xf32> to vector<4x1xf32>
    %44 = arith.addf %43, %37 : vector<4x1xf32>
    %c0_18 = arith.constant 0 : index
    %c0_19 = arith.constant 0 : index
    %c0_20 = arith.constant 0 : index
    %45 = vector.load %arg6[%c0_18, %c0_19, %c0_20] : memref<1x16x1xf32, #tpu.memory_space<vmem>>, vector<1x4x1xf32>
    %46 = vector.shape_cast %45 : vector<1x4x1xf32> to vector<4x1xf32>
    %47 = vector.shape_cast %44 : vector<4x1xf32> to vector<1x4x1xf32>
    tpu.vector_store %arg6[%c0_18, %c0_19, %c0_20], %47 {strides = array<i32>} : memref<1x16x1xf32, #tpu.memory_space<vmem>>, vector<1x4x1xf32>,
    %c0_21 = arith.constant 0 : index
    %c8 = arith.constant 8 : index
    %c0_22 = arith.constant 0 : index
    %48 = vector.load %arg6[%c0_21, %c8, %c0_22] : memref<1x16x1xf32, #tpu.memory_space<vmem>>, vector<1x4x1xf32>
    %49 = vector.shape_cast %48 : vector<1x4x1xf32> to vector<4x1xf32>
    %50 = arith.addf %49, %41 : vector<4x1xf32>
    %c0_23 = arith.constant 0 : index
    %c8_24 = arith.constant 8 : index
    %c0_25 = arith.constant 0 : index
    %51 = vector.load %arg6[%c0_23, %c8_24, %c0_25] : memref<1x16x1xf32, #tpu.memory_space<vmem>>, vector<1x4x1xf32>
    %52 = vector.shape_cast %51 : vector<1x4x1xf32> to vector<4x1xf32>
    %53 = vector.shape_cast %50 : vector<4x1xf32> to vector<1x4x1xf32>
    tpu.vector_store %arg6[%c0_23, %c8_24, %c0_25], %53 {strides = array<i32>} : memref<1x16x1xf32, #tpu.memory_space<vmem>>, vector<1x4x1xf32>,
    %c0_26 = arith.constant 0 : index
    %c4 = arith.constant 4 : index
    %c0_27 = arith.constant 0 : index
    %54 = vector.load %arg3[%c0_26, %c4, %c0_27] : memref<1x8x256xf32, #tpu.memory_space<vmem>>, vector<1x4x256xf32>
    %55 = vector.shape_cast %54 : vector<1x4x256xf32> to vector<4x256xf32>
    %c0_28 = arith.constant 0 : index
    %c1 = arith.constant 1 : index
    %c0_29 = arith.constant 0 : index
    %56 = vector.load %arg4[%c0_28, %c1, %c0_29] : memref<1x2x256xi32, #tpu.memory_space<vmem>>, vector<1x1x256xi32>
    %57 = vector.shape_cast %56 : vector<1x1x256xi32> to vector<1x256xi32>
    %58 = vector.broadcast %57 : vector<1x256xi32> to vector<4x256xi32>
    %59 = vector.broadcast %3 : vector<4x1xi32> to vector<4x256xi32>
    %60 = arith.cmpi eq, %58, %59 : vector<4x256xi32>
    %61 = arith.extui %60 : vector<4x256xi1> to vector<4x256xi32>
    %62 = arith.sitofp %61 : vector<4x256xi32> to vector<4x256xf32>
    %63 = arith.mulf %55, %62 : vector<4x256xf32>
    %cst_30 = arith.constant dense<0.000000e+00> : vector<256xf32>
    %64 = vector.multi_reduction <add>, %63, %cst_30 [0] : vector<4x256xf32> to vector<256xf32>
    %65 = vector.shape_cast %64 : vector<256xf32> to vector<1x256xf32>
    %c2_i32_31 = arith.constant 2 : i32
    %66 = arith.muli %arg0, %c2_i32_31 : i32
    %c1_i32 = arith.constant 1 : i32
    %67 = arith.addi %66, %c1_i32 : i32
    %68 = arith.index_cast %67 : i32 to index
    %69 = memref.load %arg2[%68] : memref<8xi32, #tpu.memory_space<smem>>
    %c0_i32_32 = arith.constant 0 : i32
    %70 = vector.broadcast %c0_i32_32 : i32 to vector<1x256xi32>
    %71 = arith.cmpi sge, %57, %70 : vector<1x256xi32>
    %72 = vector.broadcast %69 : i32 to vector<1x256xi32>
    %73 = arith.cmpi slt, %57, %72 : vector<1x256xi32>
    %74 = arith.andi %71, %73 : vector<1x256xi1>
    %75 = arith.extui %74 : vector<1x256xi1> to vector<1x256xi32>
    %76 = arith.sitofp %75 : vector<1x256xi32> to vector<1x256xf32>
    %cst_33 = arith.constant 1.000000e-30 : f32
    %77 = vector.broadcast %cst_33 : f32 to vector<1x256xf32>
    %78 = arith.maximumf %65, %77 : vector<1x256xf32>
    %79 = math.log %78 : vector<1x256xf32>
    %cst_34 = arith.constant 0.000000e+00 : f32
    %80 = vector.broadcast %cst_34 : f32 to vector<1x256xf32>
    %81 = arith.subf %80, %79 : vector<1x256xf32>
    %82 = arith.mulf %76, %81 : vector<1x256xf32>
    %c0_35 = arith.constant 0 : index
    %c1_36 = arith.constant 1 : index
    %c0_37 = arith.constant 0 : index
    %83 = vector.load %arg5[%c0_35, %c1_36, %c0_37] : memref<1x2x256xf32, #tpu.memory_space<vmem>>, vector<1x1x256xf32>
    %84 = vector.shape_cast %83 : vector<1x1x256xf32> to vector<1x256xf32>
    %85 = vector.shape_cast %82 : vector<1x256xf32> to vector<1x1x256xf32>
    tpu.vector_store %arg5[%c0_35, %c1_36, %c0_37], %85 {strides = array<i32>} : memref<1x2x256xf32, #tpu.memory_space<vmem>>, vector<1x1x256xf32>,
    %cst_38 = arith.constant dense<0.000000e+00> : vector<4xf32>
    %86 = vector.multi_reduction <add>, %63, %cst_38 [1] : vector<4x256xf32> to vector<4xf32>
    %87 = vector.shape_cast %86 : vector<4xf32> to vector<4x1xf32>
    %88 = arith.addf %55, %62 : vector<4x256xf32>
    %89 = arith.subf %88, %63 : vector<4x256xf32>
    %cst_39 = arith.constant dense<0.000000e+00> : vector<4xf32>
    %90 = vector.multi_reduction <add>, %89, %cst_39 [1] : vector<4x256xf32> to vector<4xf32>
    %91 = vector.shape_cast %90 : vector<4xf32> to vector<4x1xf32>
    %c0_40 = arith.constant 0 : index
    %c4_41 = arith.constant 4 : index
    %c0_42 = arith.constant 0 : index
    %92 = vector.load %arg6[%c0_40, %c4_41, %c0_42] : memref<1x16x1xf32, #tpu.memory_space<vmem>>, vector<1x4x1xf32>
    %93 = vector.shape_cast %92 : vector<1x4x1xf32> to vector<4x1xf32>
    %94 = arith.addf %93, %87 : vector<4x1xf32>
    %c0_43 = arith.constant 0 : index
    %c4_44 = arith.constant 4 : index
    %c0_45 = arith.constant 0 : index
    %95 = vector.load %arg6[%c0_43, %c4_44, %c0_45] : memref<1x16x1xf32, #tpu.memory_space<vmem>>, vector<1x4x1xf32>
    %96 = vector.shape_cast %95 : vector<1x4x1xf32> to vector<4x1xf32>
    %97 = vector.shape_cast %94 : vector<4x1xf32> to vector<1x4x1xf32>
    tpu.vector_store %arg6[%c0_43, %c4_44, %c0_45], %97 {strides = array<i32>} : memref<1x16x1xf32, #tpu.memory_space<vmem>>, vector<1x4x1xf32>,
    %c0_46 = arith.constant 0 : index
    %c12 = arith.constant 12 : index
    %c0_47 = arith.constant 0 : index
    %98 = vector.load %arg6[%c0_46, %c12, %c0_47] : memref<1x16x1xf32, #tpu.memory_space<vmem>>, vector<1x4x1xf32>
    %99 = vector.shape_cast %98 : vector<1x4x1xf32> to vector<4x1xf32>
    %100 = arith.addf %99, %91 : vector<4x1xf32>
    %c0_48 = arith.constant 0 : index
    %c12_49 = arith.constant 12 : index
    %c0_50 = arith.constant 0 : index
    %101 = vector.load %arg6[%c0_48, %c12_49, %c0_50] : memref<1x16x1xf32, #tpu.memory_space<vmem>>, vector<1x4x1xf32>
    %102 = vector.shape_cast %101 : vector<1x4x1xf32> to vector<4x1xf32>
    %103 = vector.shape_cast %100 : vector<4x1xf32> to vector<1x4x1xf32>
    tpu.vector_store %arg6[%c0_48, %c12_49, %c0_50], %103 {strides = array<i32>} : memref<1x16x1xf32, #tpu.memory_space<vmem>>, vector<1x4x1xf32>,
    return
  }
  func.func @transform_0(%arg0: i32, %arg1: i32, %arg2: memref<8xi32, #tpu.memory_space<smem>>) -> (i32, i32, i32) {
    %c0_i32 = arith.constant 0 : i32
    %c0_i32_0 = arith.constant 0 : i32
    return %arg0, %c0_i32, %arg1 : i32, i32, i32
  }
  func.func @transform_1(%arg0: i32, %arg1: i32, %arg2: memref<8xi32, #tpu.memory_space<smem>>) -> (i32, i32, i32) {
    %c0_i32 = arith.constant 0 : i32
    %c0_i32_0 = arith.constant 0 : i32
    return %arg0, %c0_i32, %arg1 : i32, i32, i32
  }
  func.func @transform_2(%arg0: i32, %arg1: i32, %arg2: memref<8xi32, #tpu.memory_space<smem>>) -> (i32, i32, i32) {
    %c0_i32 = arith.constant 0 : i32
    %c0_i32_0 = arith.constant 0 : i32
    return %arg0, %c0_i32, %arg1 : i32, i32, i32
  }
  func.func @transform_3(%arg0: i32, %arg1: i32, %arg2: memref<8xi32, #tpu.memory_space<smem>>) -> (i32, i32, i32) {
    %c0_i32 = arith.constant 0 : i32
    %c0_i32_0 = arith.constant 0 : i32
    %c0_i32_1 = arith.constant 0 : i32
    return %arg0, %c0_i32, %c0_i32_0 : i32, i32, i32
  }
}

</mosaic_0001>

<llo_original>
// kernel: tpu_custom_call.1
$region0: #{tpu_custom_call.1}
  #allocation0 [shape = 'u32[]', space=smem, size = 0x4, offset = 0x4, fixed_abs, tag = 'smem constant byte address 0x4 - core index']
  #allocation1 [shape = 'u32[72,128]{1,0:T(1,128)}', space=vmem, size = 0x9000, scoped, tag = 'internal scratch']
  #allocation2 [shape = 's32[1]{0}', space=sflag, size = 0x4, scoped, tag = 'scoped memory for tpu_custom_call.1']
  #allocation3 [shape = 'u8[512]{0}', space=smem, size = 0x200, scoped, tag = 'prefetched SMEM operand 0']
  %s0 = inlined_call_operand.hbm [shape: s32[8], index: 0, kind: input, shape index: {}]
  %s1 = inlined_call_operand.hbm [shape: f32[4,8,256], index: 1, kind: input, shape index: {}]
  %s2 = inlined_call_operand.hbm [shape: s32[4,2,256], index: 2, kind: input, shape index: {}]
  %s3 = inlined_call_operand.hbm [shape: f32[4,2,256], index: 3, kind: output, shape index: {0}]
  %s4 = inlined_call_operand.vmem [shape: f32[4,16,1], index: 4, kind: output, shape index: {1}]
  %5 = xla_tuple %s3, %s4
  %s6 = sld [smem:[#allocation0]]
  $region61: #{tpu_custom_call.1} parent=0
    _
  %s8 = ssub.s32 1, %s6
  %s9 = scalar_select 0, %s8, %s6
  %s11 = sshll.u32 %s0, 4
  %s12 = int_to_ptr.hbm [resolvable:$true] %s11
  %14 = dma.hbm_to_smem %s12, 16, [#allocation3], [#allocation2]
  %16 = dma.done [#allocation2], 16
  %17 = sfence
  $region1: #{tpu_custom_call.1} parent=0
    #allocation4 [shape = 'u8[16384]{0}', space=vmem, size = 0x4000, scoped, tag = 'input window, operand 1']
    #allocation5 [shape = 's32[2]{0}', space=sflag, size = 0x8, scoped, tag = 'scoped memory for tpu_custom_call.1']
    #allocation6 [shape = 's32[2]{0}', space=sflag, size = 0x8, scoped, tag = 'scoped memory for tpu_custom_call.1']
    #allocation7 [shape = 'u8[4096]{0}', space=vmem, size = 0x1000, scoped, tag = 'input window, operand 2']
    #allocation8 [shape = 's32[2]{0}', space=sflag, size = 0x8, scoped, tag = 'scoped memory for tpu_custom_call.1']
    #allocation9 [shape = 'u8[4096]{0}', space=vmem, size = 0x1000, scoped, tag = 'output window, operand 0']
    %18 = vsyncpa [#allocation5], 0
    %s19 = scalar_lea.sflag [#allocation5], 1
    %20 = vsyncpa %s19, 0
    %21 = vsyncpa [#allocation8], 0
    %s22 = scalar_lea.sflag [#allocation8], 1
    %23 = vsyncpa %s22, 0
    %24 = vsyncpa [#allocation6], 0
    %s25 = scalar_lea.sflag [#allocation6], 1
    %26 = vsyncpa %s25, 0
    loop: start=0, step=1, limit=6
    $region2: #{tpu_custom_call.1} parent=1 // loop_pre_header
      _
    $region3: #{tpu_custom_call.1} parent=1 // loop_header
      %s28 = sphi 0, %s32
      %p29 = scmp.ge.s32.totalorder %s28, 6
      %s35 = sphi 0, %s47
      %s36 = sphi 0, %s43
      %s37 = sphi 0, %s35
      %s38 = sphi 0, %s36
      %s39 = sphi 0, %s37
      %s40 = sphi 0, %s38
      %s52 = sphi 0, %s54
      %s55 = sphi 0, %s52
      %s56 = sphi 0, %s55
      %s72 = sphi 0, %s56
      %s80 = sphi 0, %s82
      %s83 = sphi 0, %s80
      %s84 = sphi 0, %s83
      %s100 = sphi 0, %s84
      %s108 = sphi 0, %s110
      %s111 = sphi 0, %s108
      %s112 = sphi 0, %s111
      %s128 = sphi 0, %s112
      %s134 = sphi 0, %s136
      %s137 = sphi 0, %s134
      %s138 = sphi 0, %s137
      %s154 = sphi 0, %s138
    $region4: #{tpu_custom_call.1} parent=1 // loop_header_branch
      %31 = sbr.rel (%p29) target = $region8
    $region5: #{tpu_custom_call.1} parent=1 // loop_body
      %s33 = ssub.s32 %s28, 1
      %s34 = ssub.s32 %s28, 2
      %s41 = sadd.s32 1, %s36
      %p42 = scmp.ge.s32.totalorder %s41, 1
      %s43 = scalar_select %p42, 0, %s41
      %s44 = sadd.s32 1, %s35
      %s45 = scalar_select %p42, %s44, %s35
      %p46 = scmp.ge.s32.totalorder %s45, 4
      %s47 = scalar_select %p46, 0, %s45
      %s48 = ssub.s32 %s35, %s47
      %s49 = ssub.s32 %s36, %s43
      %s50 = sor.u32 %s48, %s49
      %p51 = scmp.eq.s32.totalorder %s50, 0
      %s53 = sadd.s32 %s52, 1
      %s54 = scalar_select %p51, %s52, %s53
      %p57 = pneg %p51
      %p58 = scmp.eq.s32.totalorder %s28, 3
      %p59 = por %p57, %p58
      %p60 = scmp.ne.s32.totalorder %s52, %s55
      %p61 = scmp.eq.s32.totalorder %s28, 0
      %p62 = por %p60, %p61
      %p63 = scmp.ne.s32.totalorder %s52, %s55
      %p64 = scmp.eq.s32.totalorder %s33, 3
      %p65 = por %p63, %p64
      %p66 = scmp.ne.s32.totalorder %s55, %s56
      %p67 = scmp.eq.s32.totalorder %s33, 0
      %p68 = por %p66, %p67
      %p69 = scmp.ne.s32.totalorder %s55, %s56
      %p70 = scmp.eq.s32.totalorder %s34, 3
      %p71 = por %p69, %p70
      %p73 = scmp.ne.s32.totalorder %s56, %s72
      %p74 = scmp.eq.s32.totalorder %s34, 0
      %p75 = por %p73, %p74
      %s76 = ssub.s32 %s35, %s47
      %s77 = ssub.s32 %s36, %s43
      %s78 = sor.u32 %s76, %s77
      %p79 = scmp.eq.s32.totalorder %s78, 0
      %s81 = sadd.s32 %s80, 1
      %s82 = scalar_select %p79, %s80, %s81
      %p85 = pneg %p79
      %p86 = scmp.eq.s32.totalorder %s28, 3
      %p87 = por %p85, %p86
      %p88 = scmp.ne.s32.totalorder %s80, %s83
      %p89 = scmp.eq.s32.totalorder %s28, 0
      %p90 = por %p88, %p89
      %p91 = scmp.ne.s32.totalorder %s80, %s83
      %p92 = scmp.eq.s32.totalorder %s33, 3
      %p93 = por %p91, %p92
      %p94 = scmp.ne.s32.totalorder %s83, %s84
      %p95 = scmp.eq.s32.totalorder %s33, 0
      %p96 = por %p94, %p95
      %p97 = scmp.ne.s32.totalorder %s83, %s84
      %p98 = scmp.eq.s32.totalorder %s34, 3
      %p99 = por %p97, %p98
      %p101 = scmp.ne.s32.totalorder %s84, %s100
      %p102 = scmp.eq.s32.totalorder %s34, 0
      %p103 = por %p101, %p102
      %s104 = ssub.s32 %s35, %s47
      %s105 = ssub.s32 %s36, %s43
      %s106 = sor.u32 %s104, %s105
      %p107 = scmp.eq.s32.totalorder %s106, 0
      %s109 = sadd.s32 %s108, 1
      %s110 = scalar_select %p107, %s108, %s109
      %p113 = pneg %p107
      %p114 = scmp.eq.s32.totalorder %s28, 3
      %p115 = por %p113, %p114
      %p116 = scmp.ne.s32.totalorder %s108, %s111
      %p117 = scmp.eq.s32.totalorder %s28, 0
      %p118 = por %p116, %p117
      %p119 = scmp.ne.s32.totalorder %s108, %s111
      %p120 = scmp.eq.s32.totalorder %s33, 3
      %p121 = por %p119, %p120
      %p122 = scmp.ne.s32.totalorder %s111, %s112
      %p123 = scmp.eq.s32.totalorder %s33, 0
      %p124 = por %p122, %p123
      %p125 = scmp.ne.s32.totalorder %s111, %s112
      %p126 = scmp.eq.s32.totalorder %s34, 3
      %p127 = por %p125, %p126
      %p129 = scmp.ne.s32.totalorder %s112, %s128
      %p130 = scmp.eq.s32.totalorder %s34, 0
      %p131 = por %p129, %p130
      %s132 = ssub.s32 %s35, %s47
      %p133 = scmp.eq.s32.totalorder %s132, 0
      %s135 = sadd.s32 %s134, 1
      %s136 = scalar_select %p133, %s134, %s135
      %p139 = pneg %p133
      %p140 = scmp.eq.s32.totalorder %s28, 3
      %p141 = por %p139, %p140
      %p142 = scmp.ne.s32.totalorder %s134, %s137
      %p143 = scmp.eq.s32.totalorder %s28, 0
      %p144 = por %p142, %p143
      %p145 = scmp.ne.s32.totalorder %s134, %s137
      %p146 = scmp.eq.s32.totalorder %s33, 3
      %p147 = por %p145, %p146
      %p148 = scmp.ne.s32.totalorder %s137, %s138
      %p149 = scmp.eq.s32.totalorder %s33, 0
      %p150 = por %p148, %p149
      %p151 = scmp.ne.s32.totalorder %s137, %s138
      %p152 = scmp.eq.s32.totalorder %s34, 3
      %p153 = por %p151, %p152
      %p155 = scmp.ne.s32.totalorder %s138, %s154
      %p156 = scmp.eq.s32.totalorder %s34, 0
      %p157 = por %p155, %p156
      %p158 = scmp.le.s32.totalorder 1, %s28
      %p159 = scmp.lt.s32.totalorder %s28, 5
      %p160 = pnand %p158, %p159
      %p161 = pneg %p160
      // Predicated region
      $region9: #{tpu_custom_call.1} parent=5 // pred_check
        _
      $region10: #{tpu_custom_call.1} parent=5 // pred_check_branch
        %163 = sbr.rel (%p160) target = $region12
      $region11: #{tpu_custom_call.1} parent=5 // pred_region
        %s164 = ssub.s32 %s28, 1
      $region12: #{tpu_custom_call.1} parent=5 // pred_fallthru
        _
      %p165 = scmp.lt.s32.totalorder %s28, 4
      // Predicated region
      $region13: #{tpu_custom_call.1} parent=5 // pred_check
        %p166 = pneg %p165
      $region14: #{tpu_custom_call.1} parent=5 // pred_check_branch
        %168 = sbr.rel (%p166) target = $region16
      $region15: #{tpu_custom_call.1} parent=5 // pred_region
        // Predicated region
        $region17: #{tpu_custom_call.1} parent=15 // pred_check
          %p169 = pneg %p62
        $region18: #{tpu_custom_call.1} parent=15 // pred_check_branch
          %171 = sbr.rel (%p169) target = $region20
        $region19: #{tpu_custom_call.1} parent=15 // pred_region
          %s172 = sand.u32 %s52, 1
          %s173 = scalar_lea.sflag [#allocation5], %s172
          %s174 = sand.u32 %s52, 1
          %s175 = smul.addr %s174, 16
          %s176 = scalar_lea.vmem [#allocation4], %s175
          %s177 = smul.u32 2, %s36
          %179 = vsyncadd %s173, 0
          %s180 = smul.addr %s35, 2
          %s181 = sadd.s32 %s177, %s180
          %s182 = smul.addr %s181, 8
          %s183 = scalar_lea.hbm %s1, %s182
          %s185 = sshll.u32 %s183, 4
          %s186 = int_to_ptr.hbm [resolvable:$true] %s185
          %s187 = sshll.u32 %s176, 4
          %s188 = int_to_ptr.vmem [resolvable:$true] %s187
          %190 = dma.hbm_to_vmem [thread:$0]  %s186, 256, %s188, %s173
        $region20: #{tpu_custom_call.1} parent=15 // pred_fallthru
          _
        // Predicated region
        $region21: #{tpu_custom_call.1} parent=15 // pred_check
          %p191 = pneg %p90
        $region22: #{tpu_custom_call.1} parent=15 // pred_check_branch
          %193 = sbr.rel (%p191) target = $region24
        $region23: #{tpu_custom_call.1} parent=15 // pred_region
          %s194 = sand.u32 %s80, 1
          %s195 = scalar_lea.sflag [#allocation8], %s194
          %s196 = sand.u32 %s80, 1
          %s197 = smul.addr %s196, 4
          %s198 = scalar_lea.vmem [#allocation7], %s197
          %s199 = smul.u32 2, %s36
          %201 = vsyncadd %s195, 0
          %s202 = smul.addr %s35, 2
          %s203 = sadd.s32 %s199, %s202
          %s204 = smul.addr %s203, 2
          %s205 = scalar_lea.hbm %s2, %s204
          %s207 = sshll.u32 %s205, 4
          %s208 = int_to_ptr.hbm [resolvable:$true] %s207
          %s209 = sshll.u32 %s198, 4
          %s210 = int_to_ptr.vmem [resolvable:$true] %s209
          %212 = dma.hbm_to_vmem [thread:$0]  %s208, 64, %s210, %s195
        $region24: #{tpu_custom_call.1} parent=15 // pred_fallthru
          _
      $region16: #{tpu_custom_call.1} parent=5 // pred_fallthru
        _
      %p213 = scmp.le.s32.totalorder 1, %s28
      %p214 = scmp.lt.s32.totalorder %s28, 5
      %p215 = pnand %p213, %p214
      %p216 = pneg %p215
      // Predicated region
      $region25: #{tpu_custom_call.1} parent=5 // pred_check
        _
      $region26: #{tpu_custom_call.1} parent=5 // pred_check_branch
        %218 = sbr.rel (%p215) target = $region28
      $region27: #{tpu_custom_call.1} parent=5 // pred_region
        %s219 = ssub.s32 %s28, 1
        %s220 = sand.u32 %s55, 1
        %s221 = scalar_lea.sflag [#allocation5], %s220
        %s222 = sand.u32 %s55, 1
        %s223 = smul.addr %s222, 16
        %s224 = scalar_lea.vmem [#allocation4], %s223
        // Predicated region
        $region29: #{tpu_custom_call.1} parent=27 // pred_check
          %p225 = pneg %p68
        $region30: #{tpu_custom_call.1} parent=27 // pred_check_branch
          %227 = sbr.rel (%p225) target = $region32
        $region31: #{tpu_custom_call.1} parent=27 // pred_region
          %229 = dma.done %s221, 256
        $region32: #{tpu_custom_call.1} parent=27 // pred_fallthru
          _
        %s230 = sand.u32 %s83, 1
        %s231 = scalar_lea.sflag [#allocation8], %s230
        %s232 = sand.u32 %s83, 1
        %s233 = smul.addr %s232, 4
        %s234 = scalar_lea.vmem [#allocation7], %s233
        // Predicated region
        $region33: #{tpu_custom_call.1} parent=27 // pred_check
          %p235 = pneg %p96
        $region34: #{tpu_custom_call.1} parent=27 // pred_check_branch
          %237 = sbr.rel (%p235) target = $region36
        $region35: #{tpu_custom_call.1} parent=27 // pred_region
          %239 = dma.done %s231, 64
        $region36: #{tpu_custom_call.1} parent=27 // pred_fallthru
          _
        %s240 = sand.u32 %s55, 1
        %s241 = scalar_lea.sflag [#allocation5], %s240
        %s242 = sand.u32 %s55, 1
        %s243 = smul.addr %s242, 16
        %s244 = scalar_lea.vmem [#allocation4], %s243
        %p245 = pneg %p68
        %p246 = pneg %p65
        %s247 = sand.u32 %s83, 1
        %s248 = scalar_lea.sflag [#allocation8], %s247
        %s249 = sand.u32 %s83, 1
        %s250 = smul.addr %s249, 4
        %s251 = scalar_lea.vmem [#allocation7], %s250
        %p252 = pneg %p96
        %p253 = pneg %p93
        %p254 = pneg %p124
        %p255 = pneg %p121
        %s256 = sand.u32 %s111, 1
        %s257 = scalar_lea.sflag [#allocation6], %s256
        %s258 = sand.u32 %s111, 1
        %s259 = smul.addr %s258, 4
        %s260 = scalar_lea.vmem [#allocation9], %s259
        %p261 = pneg %p150
        %p262 = pneg %p147
        %p263 = scmp.lt.s32.totalorder %s37, 3
        %s264 = scalar_select %p263, %s37, 3
        %s265 = smul.addr %s264, 2
        %s266 = smul.addr %s265, 8
        %s267 = scalar_lea.vmem %s4, %s266
        %s268 = smul.u32 2, %s38
        %s269 = smul.u32 2, %s38
        %s270 = smul.u32 2, %s38
        %p271 = scmp.lt.s32.totalorder %s37, 3
        %s272 = scalar_select %p271, %s37, 3
        %s273 = smul.addr %s272, 2
        %s274 = smul.addr %s273, 8
        %s275 = scalar_lea.vmem %s4, %s274
        %p276 = scmp.eq.s32.totalorder %s38, 0
        // Predicated region
        $region37: #{tpu_custom_call.1} parent=27 // pred_check
          %p277 = pneg %p276
        $region38: #{tpu_custom_call.1} parent=27 // pred_check_branch
          %279 = sbr.rel (%p277) target = $region40
        $region39: #{tpu_custom_call.1} parent=27 // pred_region
          %vm280 = vcmask 7168
          %281 = vst.msk [vmem:[%s275] sm:$0xff] %vm280, 0.0
          %282 = vst.msk [vmem:[%s275 + $0x8] sm:$0xff] %vm280, 0.0
        $region40: #{tpu_custom_call.1} parent=27 // pred_fallthru
          _
        %v283 = vlaneseq
        %v284 = vshrl.u32 %v283, 7
        %v285 = vld [vmem:[%s224] sm:$0xf]
        %v286 = vld [vmem:[%s224 + $0x8] sm:$0xf]
        %v287 = vld [vmem:[%s234] ss:$2 sm:$0x3]
        %v288 = vperm.slane %v287, 0
        %v289 = vperm.slane %v287, 1
        %vm290 = vcmp.eq.s32.totalorder %v288, %v284
        %vm291 = vcmp.eq.s32.totalorder %v289, %v284
        %v292 = vsel %vm290, 1, 0
        %v293 = vsel %vm291, 1, 0
        %v294 = vcvt.s32.f32 %v292
        %v295 = vcvt.s32.f32 %v293
        %v296 = vmul.f32 %v285, %v294
        %v297 = vmul.f32 %v286, %v295
        %vm298 = vcmask 1043456
        %v299 = vsel %vm298, %v296, 0.0
        %v300 = vrot.slane %v299, 4
        %v301 = vadd.f32 %v299, %v300
        %v302 = vrot.slane %v301, 2
        %v303 = vadd.f32 %v301, %v302
        %v304 = vrot.slane %v303, 1
        %v305 = vadd.f32 %v303, %v304
        %v306 = vsel %vm298, %v297, 0.0
        %v307 = vrot.slane %v306, 4
        %v308 = vadd.f32 %v306, %v307
        %v309 = vrot.slane %v308, 2
        %v310 = vadd.f32 %v308, %v309
        %v311 = vrot.slane %v310, 1
        %v312 = vadd.f32 %v310, %v311
        %s313 = smul.u32 %s37, 2
        %s314 = sld [smem:[#allocation3 + %s313]]
        %vm315 = vcmp.ge.s32.totalorder %v287, 0
        %v316 = vstv %s314
        %vm317 = vcmp.lt.s32.totalorder %v287, %v316
        %vm318 = vmand %vm315, %vm317
        %v319 = vsel %vm318, 1, 0
        %v320 = vcvt.s32.f32 %v319
        %v321 = vmax.f32 %v305, 1e-30
        %v322 = vmax.f32 %v312, 1e-30
        %v323 = vlog2.pop %v321
        %v324 = vmul.f32 %v323, 0.6931472
        %v325 = vlog2.pop %v322
        %v326 = vmul.f32 %v325, 0.6931472
        %v327 = vsub.f32 0.0, %v324
        %v328 = vsub.f32 0.0, %v326
        %v331 = vrot.slane %v328, 7
        %vm332 = vcmask 1040384
        %v333 = vsel %vm332, %v327, %v331
        %v335 = vmul.f32 %v320, %v333
        %v336 = vlaneseq
        %vm337 = vcmp.ge.s32.totalorder %v336, 0
        %vm338 = vcmp.lt.s32.totalorder %v336, 256
        %vm339 = vmand %vm337, %vm338
        %340 = vst.msk [vmem:[%s260] ss:$2 sm:$0x3] %vm339, %v335
        %v341 = vadd.f32 %v299, %v306
        %342 = vadd.xlane.f32.xlu0 %v341
        %v343 = vpop.xlane.xlu0 %342
        %v344 = vadd.f32 %v285, %v294
        %v345 = vadd.f32 %v286, %v295
        %v346 = vsub.f32 %v344, %v296
        %v347 = vsub.f32 %v345, %v297
        %v348 = vsel %vm298, %v346, 0.0
        %v349 = vsel %vm298, %v347, 0.0
        %v350 = vadd.f32 %v348, %v349
        %351 = vadd.xlane.f32.xlu0 %v350
        %v352 = vpop.xlane.xlu0 %351
        %v353 = vld [vmem:[%s275] sm:$0xf]
        %v354 = vadd.f32 %v353, %v343
        %vm355 = vcmask 3072
        %356 = vst.msk [vmem:[%s275] sm:$0xf] %vm355, %v354
        %v357 = vld [vmem:[%s275 + $0x8] sm:$0xf]
        %v358 = vadd.f32 %v357, %v352
        %359 = vst.msk [vmem:[%s275 + $0x8] sm:$0xf] %vm355, %v358
        %v360 = vld [vmem:[%s224] sm:$0xf0]
        %v361 = vld [vmem:[%s224 + $0x8] sm:$0xf0]
        %s362 = scalar_lea.vmem %s234, 1 [#allocation7]
        %v363 = vld [vmem:[%s362] ss:$2 sm:$0x3]
        %v364 = vperm.slane %v363, 0
        %v365 = vperm.slane %v363, 1
        %vm366 = vcmp.eq.s32.totalorder %v364, %v284
        %vm367 = vcmp.eq.s32.totalorder %v365, %v284
        %v368 = vsel %vm366, 1, 0
        %v369 = vsel %vm367, 1, 0
        %v370 = vcvt.s32.f32 %v368
        %v371 = vcvt.s32.f32 %v369
        %v374 = vrot.slane %v370, 4
        %v375 = vrot.slane %v371, 4
        %v378 = vmul.f32 %v360, %v374
        %v379 = vmul.f32 %v361, %v375
        %v382 = vrot.slane %v378, 4
        %v383 = vrot.slane %v379, 4
        %v386 = vsel %vm298, %v382, 0.0
        %v387 = vrot.slane %v386, 4
        %v388 = vadd.f32 %v386, %v387
        %v389 = vrot.slane %v388, 2
        %v390 = vadd.f32 %v388, %v389
        %v391 = vrot.slane %v390, 1
        %v392 = vadd.f32 %v390, %v391
        %v393 = vsel %vm298, %v383, 0.0
        %v394 = vrot.slane %v393, 4
        %v395 = vadd.f32 %v393, %v394
        %v396 = vrot.slane %v395, 2
        %v397 = vadd.f32 %v395, %v396
        %v398 = vrot.slane %v397, 1
        %v399 = vadd.f32 %v397, %v398
        %s400 = sadd.s32 %s313, 1
        %s401 = sld [smem:[#allocation3 + %s400]]
        %vm402 = vcmp.ge.s32.totalorder %v363, 0
        %v403 = vstv %s401
        %vm404 = vcmp.lt.s32.totalorder %v363, %v403
        %vm405 = vmand %vm402, %vm404
        %v406 = vsel %vm405, 1, 0
        %v407 = vcvt.s32.f32 %v406
        %v408 = vmax.f32 %v392, 1e-30
        %v409 = vmax.f32 %v399, 1e-30
        %v410 = vlog2.pop %v408
        %v411 = vmul.f32 %v410, 0.6931472
        %v412 = vlog2.pop %v409
        %v413 = vmul.f32 %v412, 0.6931472
        %v414 = vsub.f32 0.0, %v411
        %v415 = vsub.f32 0.0, %v413
        %v418 = vrot.slane %v415, 7
        %v419 = vsel %vm332, %v414, %v418
        %v421 = vmul.f32 %v407, %v419
        %s422 = scalar_lea.vmem %s260, 1 [#allocation9]
        %423 = vst.msk [vmem:[%s422] ss:$2 sm:$0x3] %vm339, %v421
        %vm424 = vcmask 1047556
        %v425 = vsel %vm424, %v378, 0.0
        %v426 = vsel %vm424, %v379, 0.0
        %v427 = vadd.f32 %v425, %v426
        %428 = vadd.xlane.f32.xlu0 %v427
        %v429 = vpop.xlane.xlu0 %428
        %v430 = vadd.f32 %v360, %v374
        %v431 = vadd.f32 %v361, %v375
        %v432 = vsub.f32 %v430, %v378
        %v433 = vsub.f32 %v431, %v379
        %v434 = vsel %vm424, %v432, 0.0
        %v435 = vsel %vm424, %v433, 0.0
        %v436 = vadd.f32 %v434, %v435
        %437 = vadd.xlane.f32.xlu0 %v436
        %v438 = vpop.xlane.xlu0 %437
        %v439 = vld [vmem:[%s275 + $0x4] sm:$0xf]
        %v441 = vrot.slane %v429, 4
        %v443 = vadd.f32 %v439, %v441
        %444 = vst.msk [vmem:[%s275 + $0x4] sm:$0xf] %vm355, %v443
        %v445 = vld [vmem:[%s275 + $0xc] sm:$0xf]
        %v447 = vrot.slane %v438, 4
        %v449 = vadd.f32 %v445, %v447
        %450 = vst.msk [vmem:[%s275 + $0xc] sm:$0xf] %vm355, %v449
        %s451 = sand.u32 %s111, 1
        %s452 = scalar_lea.sflag [#allocation6], %s451
        %s453 = sand.u32 %s111, 1
        %s454 = smul.addr %s453, 4
        %s455 = scalar_lea.vmem [#allocation9], %s454
        %p456 = scmp.lt.s32.totalorder %s37, 3
        %s457 = scalar_select %p456, %s37, 3
        %s458 = smul.addr %s457, 2
        %s459 = smul.addr %s458, 8
        %s460 = scalar_lea.vmem %s4, %s459
        // Predicated region
        $region41: #{tpu_custom_call.1} parent=27 // pred_check
          %p461 = pneg %p121
        $region42: #{tpu_custom_call.1} parent=27 // pred_check_branch
          %463 = sbr.rel (%p461) target = $region44
        $region43: #{tpu_custom_call.1} parent=27 // pred_region
          %s464 = smul.u32 2, %s38
          %466 = vsyncadd %s452, 0
          %s467 = smul.addr %s37, 2
          %s468 = sadd.s32 %s464, %s467
          %s469 = smul.addr %s468, 2
          %s470 = scalar_lea.hbm %s3, %s469
          %s472 = sshll.u32 %s455, 4
          %s473 = int_to_ptr.vmem [resolvable:$true] %s472
          %s474 = sshll.u32 %s470, 4
          %s475 = int_to_ptr.hbm [resolvable:$true] %s474
          %477 = dma.vmem_to_hbm [thread:$0]  %s473, 64, %s475, %s452
        $region44: #{tpu_custom_call.1} parent=27 // pred_fallthru
          _
        // Predicated region
        $region45: #{tpu_custom_call.1} parent=27 // pred_check
          %p478 = pneg %p147
        $region46: #{tpu_custom_call.1} parent=27 // pred_check_branch
          %480 = sbr.rel (%p478) target = $region48
        $region47: #{tpu_custom_call.1} parent=27 // pred_region
          _
        $region48: #{tpu_custom_call.1} parent=27 // pred_fallthru
          _
      $region28: #{tpu_custom_call.1} parent=5 // pred_fallthru
        _
      %p481 = scmp.le.s32.totalorder 2, %s28
      // Predicated region
      $region49: #{tpu_custom_call.1} parent=5 // pred_check
        %p482 = pneg %p481
      $region50: #{tpu_custom_call.1} parent=5 // pred_check_branch
        %484 = sbr.rel (%p482) target = $region52
      $region51: #{tpu_custom_call.1} parent=5 // pred_region
        %s485 = ssub.s32 %s28, 2
        // Predicated region
        $region53: #{tpu_custom_call.1} parent=51 // pred_check
          %p486 = pneg %p127
        $region54: #{tpu_custom_call.1} parent=51 // pred_check_branch
          %488 = sbr.rel (%p486) target = $region56
        $region55: #{tpu_custom_call.1} parent=51 // pred_region
          %s489 = sand.u32 %s112, 1
          %s490 = scalar_lea.sflag [#allocation6], %s489
          %s491 = sand.u32 %s112, 1
          %s492 = smul.addr %s491, 4
          %s493 = scalar_lea.vmem [#allocation9], %s492
          %495 = dma.done %s490, 64
        $region56: #{tpu_custom_call.1} parent=51 // pred_fallthru
          _
        // Predicated region
        $region57: #{tpu_custom_call.1} parent=51 // pred_check
          %p496 = pneg %p153
        $region58: #{tpu_custom_call.1} parent=51 // pred_check_branch
          %498 = sbr.rel (%p496) target = $region60
        $region59: #{tpu_custom_call.1} parent=51 // pred_region
          %p499 = scmp.lt.s32.totalorder %s39, 3
          %s500 = scalar_select %p499, %s39, 3
          %s501 = smul.addr %s500, 2
          %s502 = smul.addr %s501, 8
          %s503 = scalar_lea.vmem %s4, %s502
        $region60: #{tpu_custom_call.1} parent=51 // pred_fallthru
          _
      $region52: #{tpu_custom_call.1} parent=5 // pred_fallthru
        _
    $region6: #{tpu_custom_call.1} parent=1 // loop_footer
      %s32 = sadd.s32 1, %s28
    $region7: #{tpu_custom_call.1} parent=1 // loop_footer_branch
      %27 = sbr.rel target = $region3
    $region8: #{tpu_custom_call.1} parent=1 // loop_exit
      _
    %504 = vsyncpa [#allocation5], 1
    %s505 = scalar_lea.sflag [#allocation5], 1
    %506 = vsyncpa %s505, 1
    %507 = vsyncpa [#allocation8], 1
    %s508 = scalar_lea.sflag [#allocation8], 1
    %509 = vsyncpa %s508, 1
    %510 = vsyncpa [#allocation6], 1
    %s511 = scalar_lea.sflag [#allocation6], 1
    %512 = vsyncpa %s511, 1

</llo_original>
